<compile_context>
chip_gen: v7x
topology: tpu7x:2x2x1
jax: 0.10.0
libtpu: 0.0.40
codegen_flags: <defaults>
</compile_context>

<pallas_src>
import functools

import jax
import jax.numpy as jnp
from jax.experimental import pallas as pl
from jax.experimental.pallas import tpu as pltpu


def _nll_loss_kernel(pred_ref, tgt_ref, out_ref, acc_ref, *, n_total, tile_rows):
    """One batch tile of the NLL reduction.

    pred_ref: (TM, C) log-probabilities, native dtype (current batch tile).
    tgt_ref : (TM, 1) int32 class indices for the same rows.
    out_ref : (8, 128) f32 block for this batch slice (only [0,0] meaningful).
    acc_ref : (1,)   f32 SMEM running sum for the current batch slice.
    """
    p = pl.program_id(0)          # batch slice (parallel across TensorCores)
    i = pl.program_id(1)          # tile within the slice (reduction axis)
    n_inner = pl.num_programs(1)

    @pl.when(i == 0)
    def _init():
        acc_ref[0] = jnp.float32(0.0)

    pred = pred_ref[...]          # (TM, C), native dtype — no whole-tile upcast
    tgt = tgt_ref[...]            # (TM, 1), int32
    tm, c = pred.shape

    # Logical (unclamped) first row of this step.  Rows past the end of the
    # batch are disabled by forcing their target to -1, which never matches a
    # lane index — this fuses the row-validity mask into the column compare.
    row_start = (p * n_inner + i) * tile_rows
    row_ids = row_start + jax.lax.broadcasted_iota(jnp.int32, (tm, 1), 0)
    tgt_eff = jnp.where(row_ids < n_total, tgt, -1)                  # (TM, 1)

    col_ids = jax.lax.broadcasted_iota(jnp.int32, (tm, c), 1)
    picked = jnp.where(col_ids == tgt_eff, pred, jnp.zeros((), pred.dtype))

    # Exact in native dtype: each row has at most one nonzero entry.
    row_vals = jnp.sum(picked, axis=1, keepdims=True)                # (TM, 1)
    acc_ref[0] += jnp.sum(row_vals.astype(jnp.float32))

    @pl.when(i == n_inner - 1)
    def _finalize():
        r = jax.lax.broadcasted_iota(jnp.int32, (8, 128), 0)
        l = jax.lax.broadcasted_iota(jnp.int32, (8, 128), 1)
        out_ref[...] = jnp.where((r == 0) & (l == 0), acc_ref[0], jnp.float32(0.0))


def _vmem_limit_bytes():
    """Generation-aware scoped-VMEM limit: 3/4 of capacity, capped at 96 MiB."""
    cap = 64 * 1024 * 1024            # conservative default (v7x per-core VMEM)
    try:
        info = pltpu.get_tpu_info()
        c = int(getattr(info, "vmem_capacity_bytes", 0) or 0)
        if 32 * 1024 * 1024 <= c <= 256 * 1024 * 1024:
            cap = c
    except Exception:
        pass
    return min(cap * 3 // 4, 96 * 1024 * 1024)


def _pick_tile_rows(n, c, itemsize, vmem_limit, max_rows_per_tile=None):
    """Largest row tile whose lane-padded footprint fits the VMEM budget."""
    c_pad = ((c + 127) // 128) * 128
    # Per-row VMEM bytes while a tile is in flight:
    #   pred block, double-buffered (lane-padded, native dtype): 2 * c_pad * itemsize
    #   target block, double-buffered ((TM,1) int32 padded to 128 lanes): 2 * 512
    #   in-kernel temporaries (int32 lane iota, native select, f32 partials,
    #   narrow (TM,1) values + margin): ~ c_pad * (8 + itemsize) + 1024
    bytes_per_row = 3 * c_pad * itemsize + 8 * c_pad + 2048
    budget = max(vmem_limit - 4 * 1024 * 1024, 2 * 1024 * 1024)
    tm = budget // bytes_per_row
    tm = max(8, (tm // 8) * 8)
    if max_rows_per_tile is not None:
        tm = max(8, min(tm, (max_rows_per_tile // 8) * 8))
    if n <= tm:
        return n                       # single full block; no (8,128) constraint
    return tm                          # multiple of 8; tail handled by row mask


def nll_loss_pallas(pred, target, trans_feat=None, *, max_rows_per_tile=None):
    """Pallas equivalent of Loss.forward(pred, target, trans_feat)."""
    del trans_feat  # accepted but unused, matching the PyTorch module
    n, c = pred.shape
    tgt2d = target.astype(jnp.int32).reshape(n, 1)
    itemsize = jnp.dtype(pred.dtype).itemsize

    vmem_limit = _vmem_limit_bytes()
    tm = _pick_tile_rows(n, c, itemsize, vmem_limit, max_rows_per_tile)

    tiles_total = -(-n // tm)                       # ceil
    num_slices = 2 if tiles_total > 1 else 1        # 2-TC split on v7x; no-op on 1-TC
    n_inner = -(-tiles_total // num_slices)         # tiles per slice

    def row_block(p, i):
        # Clamp so the trailing (fully masked) steps re-read the last valid
        # block instead of issuing an out-of-range DMA.
        return (jnp.minimum(p * n_inner + i, tiles_total - 1), 0)

    kernel = functools.partial(_nll_loss_kernel, n_total=n, tile_rows=tm)

    cost = pl.CostEstimate(
        flops=3 * n * c,
        transcendentals=0,
        bytes_accessed=n * c * itemsize + n * 4 + num_slices * 8 * 128 * 4,
    )

    out = pl.pallas_call(
        kernel,
        out_shape=jax.ShapeDtypeStruct((num_slices * 8, 128), jnp.float32),
        grid=(num_slices, n_inner),
        in_specs=[
            pl.BlockSpec((tm, c), row_block),       # pred tile, native dtype
            pl.BlockSpec((tm, 1), row_block),       # matching target rows
        ],
        out_specs=pl.BlockSpec((8, 128), lambda p, i: (p, 0)),
        scratch_shapes=[pltpu.SMEM((1,), jnp.float32)],
        compiler_params=pltpu.CompilerParams(
            dimension_semantics=("parallel", "arbitrary"),
            vmem_limit_bytes=vmem_limit,
        ),
        cost_estimate=cost,
    )(pred, tgt2d)

    return -jnp.sum(out) / n


def _ref_nll(pred, target):
    n = pred.shape[0]
    gathered = pred[jnp.arange(n), target].astype(jnp.float32)
    return -jnp.mean(gathered)


if __name__ == "__main__":
    key = jax.random.PRNGKey(0)
    k1, k2, k3, k4, k5, k6 = jax.random.split(key, 6)

    # --- primary demo: small shapes consistent with the module ---------------
    N, C = 8, 32
    logits = jax.random.normal(k1, (N, C), dtype=jnp.float32)
    pred = jax.nn.log_softmax(logits, axis=-1)            # NLL expects log-probs
    target = jax.random.randint(k2, (N,), 0, C, dtype=jnp.int32)
    trans_feat = jax.random.normal(k1, (N, 3, 3), dtype=jnp.float32)  # unused

    loss = nll_loss_pallas(pred, target, trans_feat)
    jax.block_until_ready(loss)
    ref = _ref_nll(pred, target)
    assert jnp.allclose(loss, ref, atol=1e-6, rtol=1e-6), (loss, ref)

    # --- multi-tile grid + 2-slice split + clamped tail + partial last tile ---
    N2, C2 = 1100, 128
    logits2 = jax.random.normal(k3, (N2, C2), dtype=jnp.float32)
    pred2 = jax.nn.log_softmax(logits2, axis=-1)
    target2 = jax.random.randint(k4, (N2,), 0, C2, dtype=jnp.int32)
    loss2 = nll_loss_pallas(pred2, target2, max_rows_per_tile=128)
    jax.block_until_ready(loss2)
    ref2 = _ref_nll(pred2, target2)
    assert jnp.allclose(loss2, ref2, atol=1e-5, rtol=1e-5), (loss2, ref2)

    # --- native-dtype (bf16) path: no host-side or whole-tile upcast ----------
    N3, C3 = 16, 64
    logits3 = jax.random.normal(k5, (N3, C3), dtype=jnp.float32)
    pred3 = jax.nn.log_softmax(logits3, axis=-1).astype(jnp.bfloat16)
    target3 = jax.random.randint(k6, (N3,), 0, C3, dtype=jnp.int32)
    loss3 = nll_loss_pallas(pred3, target3)
    jax.block_until_ready(loss3)
    ref3 = _ref_nll(pred3, target3)
    assert jnp.allclose(loss3, ref3, atol=1e-5, rtol=1e-5), (loss3, ref3)

    print("KERNEL_OK")
</pallas_src>

<mosaic_0001>
module attributes {stable_mosaic.version = 11 : i64} {
  func.func @_nll_loss_kernel(%arg0: i32, %arg1: i32, %arg2: memref<8x32xf32, #tpu.memory_space<vmem>>, %arg3: memref<8x1xi32, #tpu.memory_space<vmem>>, %arg4: memref<8x128xf32, #tpu.memory_space<vmem>>, %arg5: memref<1xf32, #tpu.memory_space<smem>>) attributes {dimension_semantics = [#tpu.dimension_semantics<parallel>, #tpu.dimension_semantics<arbitrary>], iteration_bounds = array<i64: 1, 1>, scalar_prefetch = 0 : i64, scratch_operands = 1 : i64, tpu.core_type = #tpu.core_type<tc>, window_params = [{transform_indices = @transform_0, window_bounds = array<i64: 8, 32>}, {transform_indices = @transform_1, window_bounds = array<i64: 8, 1>}, {transform_indices = @transform_2, window_bounds = array<i64: 8, 128>}]} {
    %c0_i32 = arith.constant 0 : i32
    %0 = arith.cmpi eq, %arg1, %c0_i32 : i32
    %1 = arith.extui %0 : i1 to i32
    %c0_i32_0 = arith.constant 0 : i32
    %2 = arith.cmpi ne, %1, %c0_i32_0 : i32
    scf.if %2 {
      %cst_11 = arith.constant 0.000000e+00 : f32
      %c0_12 = arith.constant 0 : index
      %32 = memref.load %arg5[%c0_12] : memref<1xf32, #tpu.memory_space<smem>>
      memref.store %cst_11, %arg5[%c0_12] : memref<1xf32, #tpu.memory_space<smem>>
    } else {
    }
    %c0 = arith.constant 0 : index
    %c0_1 = arith.constant 0 : index
    %3 = vector.load %arg2[%c0, %c0_1] : memref<8x32xf32, #tpu.memory_space<vmem>>, vector<8x32xf32>
    %c0_2 = arith.constant 0 : index
    %c0_3 = arith.constant 0 : index
    %4 = vector.load %arg3[%c0_2, %c0_3] : memref<8x1xi32, #tpu.memory_space<vmem>>, vector<8x1xi32>
    %c1_i32 = arith.constant 1 : i32
    %5 = arith.muli %arg0, %c1_i32 : i32
    %6 = arith.addi %5, %arg1 : i32
    %c8_i32 = arith.constant 8 : i32
    %7 = arith.muli %6, %c8_i32 : i32
    %8 = tpu.iota {dimensions = array<i32: 0>} : vector<8x1xi32>
    %9 = vector.broadcast %7 : i32 to vector<8x1xi32>
    %10 = arith.addi %9, %8 : vector<8x1xi32>
    %c8_i32_4 = arith.constant 8 : i32
    %11 = vector.broadcast %c8_i32_4 : i32 to vector<8x1xi32>
    %12 = arith.cmpi slt, %10, %11 : vector<8x1xi32>
    %c-1_i32 = arith.constant -1 : i32
    %13 = vector.broadcast %c-1_i32 : i32 to vector<8x1xi32>
    %14 = arith.select %12, %4, %13 : vector<8x1xi1>, vector<8x1xi32>
    %15 = tpu.iota {dimensions = array<i32: 1>} : vector<8x32xi32>
    %16 = vector.broadcast %14 : vector<8x1xi32> to vector<8x32xi32>
    %17 = arith.cmpi eq, %15, %16 : vector<8x32xi32>
    %cst = arith.constant 0.000000e+00 : f32
    %18 = vector.broadcast %cst : f32 to vector<8x32xf32>
    %19 = arith.select %17, %3, %18 : vector<8x32xi1>, vector<8x32xf32>
    %cst_5 = arith.constant dense<0.000000e+00> : vector<8xf32>
    %20 = vector.multi_reduction <add>, %19, %cst_5 [1] : vector<8x32xf32> to vector<8xf32>
    %21 = vector.shape_cast %20 : vector<8xf32> to vector<8x1xf32>
    %c0_6 = arith.constant 0 : index
    %22 = memref.load %arg5[%c0_6] : memref<1xf32, #tpu.memory_space<smem>>
    %23 = vector.shape_cast %21 : vector<8x1xf32> to vector<1x8x1xf32>
    %cst_7 = arith.constant dense<0.000000e+00> : vector<1xf32>
    %24 = vector.multi_reduction <add>, %23, %cst_7 [1, 2] : vector<1x8x1xf32> to vector<1xf32>
    %25 = vector.shape_cast %24 : vector<1xf32> to vector<1x1x1xf32>
    %26 = vector.extract %25[0, 0, 0] : f32 from vector<1x1x1xf32>
    %27 = arith.addf %22, %26 : f32
    %c0_8 = arith.constant 0 : index
    %28 = memref.load %arg5[%c0_8] : memref<1xf32, #tpu.memory_space<smem>>
    memref.store %27, %arg5[%c0_8] : memref<1xf32, #tpu.memory_space<smem>>
    %c0_i32_9 = arith.constant 0 : i32
    %29 = arith.cmpi eq, %arg1, %c0_i32_9 : i32
    %30 = arith.extui %29 : i1 to i32
    %c0_i32_10 = arith.constant 0 : i32
    %31 = arith.cmpi ne, %30, %c0_i32_10 : i32
    scf.if %31 {
      %32 = tpu.iota {dimensions = array<i32: 0>} : vector<8x128xi32>
      %33 = tpu.iota {dimensions = array<i32: 1>} : vector<8x128xi32>
      %c0_i32_11 = arith.constant 0 : i32
      %34 = vector.broadcast %c0_i32_11 : i32 to vector<8x128xi32>
      %35 = arith.cmpi eq, %32, %34 : vector<8x128xi32>
      %c0_i32_12 = arith.constant 0 : i32
      %36 = vector.broadcast %c0_i32_12 : i32 to vector<8x128xi32>
      %37 = arith.cmpi eq, %33, %36 : vector<8x128xi32>
      %38 = arith.andi %35, %37 : vector<8x128xi1>
      %c0_13 = arith.constant 0 : index
      %39 = memref.load %arg5[%c0_13] : memref<1xf32, #tpu.memory_space<smem>>
      %cst_14 = arith.constant 0.000000e+00 : f32
      %40 = vector.broadcast %39 : f32 to vector<8x128xf32>
      %41 = vector.broadcast %cst_14 : f32 to vector<8x128xf32>
      %42 = arith.select %38, %40, %41 : vector<8x128xi1>, vector<8x128xf32>
      %c0_15 = arith.constant 0 : index
      %c0_16 = arith.constant 0 : index
      %43 = vector.load %arg4[%c0_15, %c0_16] : memref<8x128xf32, #tpu.memory_space<vmem>>, vector<8x128xf32>
      tpu.vector_store %arg4[%c0_15, %c0_16], %42 {strides = array<i32>} : memref<8x128xf32, #tpu.memory_space<vmem>>, vector<8x128xf32>,
    } else {
    }
    return
  }
  func.func @transform_0(%arg0: i32, %arg1: i32) -> (i32, i32) {
    %c1_i32 = arith.constant 1 : i32
    %0 = arith.muli %arg0, %c1_i32 : i32
    %1 = arith.addi %0, %arg1 : i32
    %c0_i32 = arith.constant 0 : i32
    %2 = arith.minsi %1, %c0_i32 : i32
    %c0_i32_0 = arith.constant 0 : i32
    %c0_i32_1 = arith.constant 0 : i32
    return %2, %c0_i32_0 : i32, i32
  }
  func.func @transform_1(%arg0: i32, %arg1: i32) -> (i32, i32) {
    %c1_i32 = arith.constant 1 : i32
    %0 = arith.muli %arg0, %c1_i32 : i32
    %1 = arith.addi %0, %arg1 : i32
    %c0_i32 = arith.constant 0 : i32
    %2 = arith.minsi %1, %c0_i32 : i32
    %c0_i32_0 = arith.constant 0 : i32
    %c0_i32_1 = arith.constant 0 : i32
    return %2, %c0_i32_0 : i32, i32
  }
  func.func @transform_2(%arg0: i32, %arg1: i32) -> (i32, i32) {
    %c0_i32 = arith.constant 0 : i32
    %c0_i32_0 = arith.constant 0 : i32
    return %arg0, %c0_i32 : i32, i32
  }
}

</mosaic_0001>

<llo_original>
// kernel: tpu_custom_call.1
$region0: #{tpu_custom_call.1}
  #allocation0 [shape = 'u32[]', space=smem, size = 0x4, offset = 0x4, fixed_abs, tag = 'smem constant byte address 0x4 - core index']
  #allocation1 [shape = 'u32[144,128]{1,0:T(1,128)}', space=vmem, size = 0x12000, scoped, tag = 'internal scratch']
  #allocation2 [shape = 'f32[1]{0:T(128)}', space=smem, size = 0x200, scoped, tag = 'scratch operand']
  %s0 = inlined_call_operand.vmem [shape: f32[8,32], index: 0, kind: input, shape index: {}]
  %s1 = inlined_call_operand.vmem [shape: s32[8,1], index: 1, kind: input, shape index: {}]
  %s2 = inlined_call_operand.hbm [shape: f32[8,128], index: 2, kind: output, shape index: {}]
  %s3 = sld [smem:[#allocation0]]
  $region26: #{tpu_custom_call.1} parent=0
    _
  %s5 = ssub.s32 1, %s3
  %s6 = scalar_select 0, %s5, %s3
  $region1: #{tpu_custom_call.1} parent=0
    #allocation3 [shape = 'u8[4096]{0}', space=vmem, size = 0x1000, scoped, tag = 'output window, operand 0, single buffered']
    #allocation4 [shape = 's32[1]{0}', space=sflag, size = 0x4, scoped, tag = 'scoped memory for tpu_custom_call.1']
    %7 = vsyncpa [#allocation4], 0
    // Predicated region
    $region2: #{tpu_custom_call.1} parent=1 // pred_check
      _
    $region3: #{tpu_custom_call.1} parent=1 // pred_check_branch
      %9 = sbr.rel (0) target = $region5
    $region4: #{tpu_custom_call.1} parent=1 // pred_region
      %s10 = sadd.s32 0, 0
      %p11 = scmp.lt.s32.totalorder %s10, 0
      %s12 = scalar_select %p11, %s10, 0
      %p13 = scmp.lt.s32.totalorder %s12, 0
      %s14 = scalar_select %p13, %s12, 0
      %s15 = smul.addr %s14, 8
      %s16 = scalar_lea.vmem %s0, %s15
      %s17 = sadd.s32 0, 0
      %p18 = scmp.lt.s32.totalorder %s17, 0
      %s19 = scalar_select %p18, %s17, 0
    $region5: #{tpu_custom_call.1} parent=1 // pred_fallthru
      _
    // Predicated region
    $region6: #{tpu_custom_call.1} parent=1 // pred_check
      _
    $region7: #{tpu_custom_call.1} parent=1 // pred_check_branch
      %21 = sbr.rel (0) target = $region9
    $region8: #{tpu_custom_call.1} parent=1 // pred_region
      %s22 = sadd.s32 0, 0
      %p23 = scmp.lt.s32.totalorder %s22, 0
      %s24 = scalar_select %p23, %s22, 0
      %p25 = scmp.lt.s32.totalorder %s24, 0
      %s26 = scalar_select %p25, %s24, 0
      %s27 = smul.addr %s26, 8
      %s28 = scalar_lea.vmem %s1, %s27
      %s29 = sadd.s32 0, 0
      %p30 = scmp.lt.s32.totalorder %s29, 0
      %s31 = scalar_select %p30, %s29, 0
    $region9: #{tpu_custom_call.1} parent=1 // pred_fallthru
      _
    %s32 = sadd.s32 0, 0
    %p33 = scmp.lt.s32.totalorder %s32, 0
    %s34 = scalar_select %p33, %s32, 0
    %p35 = scmp.lt.s32.totalorder %s34, 0
    %s36 = scalar_select %p35, %s34, 0
    %s37 = smul.addr %s36, 8
    %s38 = scalar_lea.vmem %s0, %s37
    %s39 = sadd.s32 0, 0
    %p40 = scmp.lt.s32.totalorder %s39, 0
    %s41 = scalar_select %p40, %s39, 0
    %p42 = scmp.lt.s32.totalorder %s41, 0
    %s43 = scalar_select %p42, %s41, 0
    %s44 = smul.addr %s43, 8
    %s45 = scalar_lea.vmem %s1, %s44
    %s46 = sadd.s32 0, 0
    %p47 = scmp.lt.s32.totalorder %s46, 0
    %s48 = scalar_select %p47, %s46, 0
    %p49 = scmp.lt.s32.totalorder %s48, 0
    %s50 = scalar_select %p49, %s48, 0
    %s51 = smul.addr %s50, 8
    %s52 = scalar_lea.vmem %s0, %s51
    %s53 = sadd.s32 0, 0
    %p54 = scmp.lt.s32.totalorder %s53, 0
    %s55 = scalar_select %p54, %s53, 0
    %s56 = sadd.s32 0, 0
    %p57 = scmp.lt.s32.totalorder %s56, 0
    %s58 = scalar_select %p57, %s56, 0
    %p59 = scmp.lt.s32.totalorder %s58, 0
    %s60 = scalar_select %p59, %s58, 0
    %s61 = smul.addr %s60, 8
    %s62 = scalar_lea.vmem %s1, %s61
    %s63 = sadd.s32 0, 0
    %p64 = scmp.lt.s32.totalorder %s63, 0
    %s65 = scalar_select %p64, %s63, 0
    %p66 = scmp.eq.s32.totalorder 0, 0
    // Predicated region
    $region10: #{tpu_custom_call.1} parent=1 // pred_check
      %p67 = pneg %p66
    $region11: #{tpu_custom_call.1} parent=1 // pred_check_branch
      %69 = sbr.rel (%p67) target = $region13
    $region12: #{tpu_custom_call.1} parent=1 // pred_region
      %s70 = scalar_lea.smem [#allocation2], 0
      %71 = sst [smem:[%s70]] 0.0
    $region13: #{tpu_custom_call.1} parent=1 // pred_fallthru
      _
    %v72 = vld [vmem:[%s52] sm:$0xff]
    %v73 = vld [vmem:[%s62] sm:$0xff]
    %s74 = sadd.s32 0, 0
    %s75 = smul.u32 %s74, 8
    %v76 = vlaneseq
    %v77 = vshrl.u32 %v76, 7
    %v78 = vstv %s75
    %v79 = vadd.s32 %v78, %v77
    %vm80 = vcmp.lt.s32.totalorder %v79, 8
    %v81 = vsel %vm80, %v73, 4294967295
    %v82 = vlaneseq
    %v83 = vand.u32 %v82, 127
    %84 = vset.pattern.permute.xlu0 0
    %85 = vperm.xlu0 %84, %v81
    %v86 = vpop.permute.xlu0 %85
    %vm87 = vcmp.eq.s32.totalorder %v83, %v86
    %v88 = vsel %vm87, %v72, 0.0
    %vm89 = vcmask 261120
    %v90 = vsel %vm89, %v88, 0.0
    %91 = vadd.xlane.f32.xlu0 %v90
    %v92 = vpop.xlane.xlu0 %91
    %s93 = sld [smem:[#allocation2]]
    %vm94 = vcmask 7168
    %v95 = vsel %vm94, %v92, 0.0
    %96 = vadd.xlane.f32.xlu0 %v95
    %v97 = vpop.xlane.xlu0 %96
    %v98 = vrot.slane %v97, 4
    %v99 = vadd.f32 %v97, %v98
    %v100 = vrot.slane %v99, 2
    %v101 = vadd.f32 %v99, %v100
    %v102 = vrot.slane %v101, 1
    %v103 = vadd.f32 %v101, %v102
    %s104 = vtos %v103
    %s105 = sadd.f32 %s93, %s104
    %s106 = scalar_lea.smem [#allocation2], 0
    %107 = sst [smem:[%s106]] %s105
    // Predicated region
    $region14: #{tpu_custom_call.1} parent=1 // pred_check
      %p108 = pneg %p66
    $region15: #{tpu_custom_call.1} parent=1 // pred_check_branch
      %110 = sbr.rel (%p108) target = $region17
    $region16: #{tpu_custom_call.1} parent=1 // pred_region
      %vm111 = vcmp.eq.s32.totalorder %v77, 0
      %vm112 = vcmp.eq.s32.totalorder %v83, 0
      %vm113 = vmand %vm111, %vm112
      %s114 = sld [smem:[#allocation2]]
      %v115 = vstv %s114
      %v116 = vsel %vm113, %v115, 0.0
      %117 = vst [vmem:[#allocation3] sm:$0xff] %v116
    $region17: #{tpu_custom_call.1} parent=1 // pred_fallthru
      _
    // Predicated region
    $region18: #{tpu_custom_call.1} parent=1 // pred_check
      _
    $region19: #{tpu_custom_call.1} parent=1 // pred_check_branch
      %119 = sbr.rel (0) target = $region21
    $region20: #{tpu_custom_call.1} parent=1 // pred_region
      %s121 = ssub.s32 128, 128
      %122 = vsyncadd [#allocation4], %s121
      %s124 = sshll.u32 [#allocation3], 4
      %s125 = int_to_ptr.vmem [resolvable:$true] %s124
      %127 = dma.vmem_to_hbm [thread:$0]  %s125, 128, %s2, [#allocation4]
    $region21: #{tpu_custom_call.1} parent=1 // pred_fallthru
      _
    // Predicated region
    $region22: #{tpu_custom_call.1} parent=1 // pred_check
      _
    $region23: #{tpu_custom_call.1} parent=1 // pred_check_branch
      %129 = sbr.rel (0) target = $region25
    $region24: #{tpu_custom_call.1} parent=1 // pred_region
      %130 = dma.done [#allocation4], 128
    $region25: #{tpu_custom_call.1} parent=1 // pred_fallthru
      _
    %131 = vsyncpa [#allocation4], 1

</llo_original>
